<compile_context>
chip_gen: v5e
topology: v5e:2x2
jax: 0.10.0
libtpu: 0.0.40
codegen_flags: <defaults>
</compile_context>

<pallas_src>
from functools import partial

import jax
import jax.numpy as jnp
from jax.experimental import pallas as pl
from jax.experimental.pallas import tpu as pltpu

LANE = 128  # head-slab lane width / padded logit width


def _ru8(n):
    return (n + 7) // 8 * 8


# ------------------------------ Pallas kernel -------------------------------
def head_kernel(feat_ref, lstm_ref, head_ref, out_ref,
                o0_ref, o0r_ref, o1_ref, o1r_ref):
    f32 = jnp.float32
    B = feat_ref.shape[0]
    T = B                                    # unbatched sequence of length B
    H8 = lstm_ref.shape[1]                   # 8 * hidden
    H = H8 // 8
    H2 = 2 * H
    LP = head_ref.shape[1]                   # padded logit width (128)

    # features.mean(dim=1)
    x = jnp.mean(feat_ref[...].astype(f32), axis=1)              # (T, H)
    # row-reversed copy (T static & tiny -> unrolled gather, off critical path)
    x_rev = jnp.concatenate([x[T - 1 - s:T - s, :] for s in range(T)], axis=0)

    # lane mask for the "g" (cell candidate) band -> tanh; all others sigmoid
    lane = jax.lax.broadcasted_iota(jnp.int32, (1, H8), 1)
    g_band = (lane >= 4 * H) & (lane < 6 * H)

    def bilstm(xin, xin_rev, row0, ofwd_ref, orev_ref):
        """One bidirectional LSTM layer, both directions in a single recurrence.

        Combined state at step s: h = [h_fwd(t=s) | h_bwd(t=T-1-s)], c likewise.
        Gate bands in z (each 2H wide, [fwd|bwd]): i | f | g | o.
        ofwd_ref[s]     <- h(step s)      (forward half is time-ordered)
        orev_ref[T-1-s] <- h(step s)      (backward half is time-ordered)
        """
        kin = xin.shape[1]
        m_same = lstm_ref[row0:row0 + kin, :]                        # (kin, 8H)
        m_cross = lstm_ref[row0 + kin:row0 + 2 * kin, :]             # (kin, 8H)
        whh = lstm_ref[row0 + 2 * kin:row0 + 2 * kin + H2, :]        # (2H, 8H)
        bias = lstm_ref[row0 + 2 * kin + H2:row0 + 2 * kin + H2 + 1, :]

        # hoisted input projection (not on the serial critical path)
        xp = (jnp.dot(xin, m_same, preferred_element_type=f32)
              + jnp.dot(xin_rev, m_cross, preferred_element_type=f32)
              + bias)                                                # (T, 8H)

        h = jnp.zeros((1, H2), f32)
        c = jnp.zeros((1, H2), f32)
        for s in range(T):                   # static unroll; serial recurrence
            z = xp[s:s + 1, :] + jnp.dot(h, whh, preferred_element_type=f32)
            # one tanh pass: sigmoid(z) = 0.5*(1 + tanh(z/2))
            t = jnp.tanh(jnp.where(g_band, z, 0.5 * z))
            act = jnp.where(g_band, t, 0.5 * t + 0.5)
            i_g = act[:, 0:H2]
            f_g = act[:, H2:2 * H2]
            g_g = act[:, 2 * H2:3 * H2]
            o_g = act[:, 3 * H2:4 * H2]
            c = f_g * c + i_g * g_g
            h = o_g * jnp.tanh(c)
            ofwd_ref[s:s + 1, :] = h
            orev_ref[T - 1 - s:T - s, :] = h

    # layer 0 (input width H)
    bilstm(x, x_rev, 0, o0_ref, o0r_ref)
    # layer 1 (input width 2H), fed by layer-0 combined outputs + reversed copy
    row1 = _ru8(4 * H + 1)
    bilstm(o0_ref[...], o0r_ref[...], row1, o1_ref, o1r_ref)

    # classification head (dropout == identity in eval mode)
    o1 = o1_ref[...]      # row t = [h_f(t)     | h_b(T-1-t)]
    o1r = o1r_ref[...]    # row t = [h_f(T-1-t) | h_b(t)    ]
    wd_a = head_ref[0:H2, :]             # acts on h_f(t): top half real, rest 0
    wd_b = head_ref[H2:2 * H2, :]        # acts on h_b(t): bottom half real
    wo = head_ref[2 * H2:2 * H2 + LP, :]
    bd = head_ref[2 * H2 + LP:2 * H2 + LP + 1, :]
    bo = head_ref[2 * H2 + LP + 1:2 * H2 + LP + 2, :]
    d = jnp.tanh(jnp.dot(o1, wd_a, preferred_element_type=f32)
                 + jnp.dot(o1r, wd_b, preferred_element_type=f32) + bd)
    logits = jnp.dot(d, wo, preferred_element_type=f32) + bo        # (T, LP)
    out_ref[...] = logits.astype(out_ref.dtype)


# ------------------------ one-time host-side packing ------------------------
def pack_params(p, H, num_labels):
    """Pack the 20 PyTorch tensors into two lane-dense f32 slabs (done once)."""
    f32 = jnp.float32
    H2, H8 = 2 * H, 8 * H
    assert H <= LANE and num_labels <= LANE

    def gate_t(w):
        # PyTorch (4H, IN) with gate order i,f,g,o -> (4, IN, H) pre-transposed
        return jnp.transpose(jnp.asarray(w, f32).reshape(4, H, w.shape[1]),
                             (0, 2, 1))

    def bands(g):
        cf = slice(2 * H * g, 2 * H * g + H)          # forward band of gate g
        cb = slice(2 * H * g + H, 2 * H * (g + 1))    # backward band of gate g
        return cf, cb

    def layer_blocks(layer, kin):
        wih_f = gate_t(p[f"weight_ih_l{layer}"])              # (4, kin, H)
        wih_b = gate_t(p[f"weight_ih_l{layer}_reverse"])
        whh_f = gate_t(p[f"weight_hh_l{layer}"])              # (4, H, H)
        whh_b = gate_t(p[f"weight_hh_l{layer}_reverse"])
        b_f = (p[f"bias_ih_l{layer}"] + p[f"bias_hh_l{layer}"]).reshape(4, H)
        b_b = (p[f"bias_ih_l{layer}_reverse"]
               + p[f"bias_hh_l{layer}_reverse"]).reshape(4, H)

        m_same = jnp.zeros((kin, H8), f32)
        m_cross = jnp.zeros((kin, H8), f32)
        whh = jnp.zeros((H2, H8), f32)
        bias = jnp.zeros((1, H8), f32)
        for g in range(4):
            cf, cb = bands(g)
            whh = whh.at[0:H, cf].set(whh_f[g]).at[H:H2, cb].set(whh_b[g])
            bias = bias.at[0, cf].set(b_f[g]).at[0, cb].set(b_b[g])
            if kin == H:
                # layer 0: fwd direction reads x(s), bwd reads x(T-1-s)
                m_same = m_same.at[:, cf].set(wih_f[g])
                m_cross = m_cross.at[:, cb].set(wih_b[g])
            else:
                # layer 1 inputs come from combined layer-0 outputs:
                #   o0[s]  = [h_f(s)     | h_b(T-1-s)]
                #   o0r[s] = [h_f(T-1-s) | h_b(s)    ]
                m_same = m_same.at[0:H, cf].set(wih_f[g][0:H, :])      # h_f(s)     -> fwd
                m_same = m_same.at[H:H2, cb].set(wih_b[g][H:H2, :])    # h_b(T-1-s) -> bwd
                m_cross = m_cross.at[H:H2, cf].set(wih_f[g][H:H2, :])  # h_b(s)     -> fwd
                m_cross = m_cross.at[0:H, cb].set(wih_b[g][0:H, :])    # h_f(T-1-s) -> bwd
        return m_same, m_cross, whh, bias

    row1 = _ru8(4 * H + 1)
    lstm_slab = jnp.zeros((_ru8(row1 + 6 * H + 1), H8), f32)
    for layer, (kin, row0) in enumerate(((H, 0), (H2, row1))):
        m_same, m_cross, whh, bias = layer_blocks(layer, kin)
        lstm_slab = (lstm_slab
                     .at[row0:row0 + kin, :].set(m_same)
                     .at[row0 + kin:row0 + 2 * kin, :].set(m_cross)
                     .at[row0 + 2 * kin:row0 + 2 * kin + H2, :].set(whh)
                     .at[row0 + 2 * kin + H2, :].set(bias[0]))

    L = num_labels
    head_slab = jnp.zeros((_ru8(2 * H2 + LANE + 2), LANE), f32)
    wd_t = jnp.asarray(p["dense_w"], f32).T                           # (2H, H)
    head_slab = head_slab.at[0:H, 0:H].set(wd_t[0:H, :])              # wd_a
    head_slab = head_slab.at[H2 + H:2 * H2, 0:H].set(wd_t[H:H2, :])   # wd_b
    head_slab = head_slab.at[2 * H2:2 * H2 + H, 0:L].set(
        jnp.asarray(p["out_proj_w"], f32).T)                          # wo (padded)
    head_slab = head_slab.at[2 * H2 + LANE, 0:H].set(jnp.asarray(p["dense_b"], f32))
    head_slab = head_slab.at[2 * H2 + LANE + 1, 0:L].set(jnp.asarray(p["out_proj_b"], f32))
    return lstm_slab, head_slab


# ------------------------------ JAX wrapper ---------------------------------
@partial(jax.jit, static_argnames=("num_labels",))
def sentiment_head_forward(features, lstm_slab, head_slab, *, num_labels):
    B, _, H = features.shape
    out = pl.pallas_call(
        head_kernel,
        out_shape=jax.ShapeDtypeStruct((B, head_slab.shape[1]), jnp.float32),
        in_specs=[pl.BlockSpec(memory_space=pltpu.MemorySpace.VMEM)] * 3,
        out_specs=pl.BlockSpec(memory_space=pltpu.MemorySpace.VMEM),
        scratch_shapes=[pltpu.VMEM((B, 2 * H), jnp.float32)] * 4,
    )(features, lstm_slab, head_slab)
    return out[:, :num_labels]


# --------------------- deterministic synthetic parameters -------------------
def init_params(key, H, L):
    p = {}
    keys = iter(jax.random.split(key, 32))
    kk = 1.0 / (H ** 0.5)

    def u(shape, bound=kk):
        return jax.random.uniform(next(keys), shape, jnp.float32, -bound, bound)

    for layer, in_size in ((0, H), (1, 2 * H)):
        for suffix in ("", "_reverse"):
            p[f"weight_ih_l{layer}{suffix}"] = u((4 * H, in_size))
            p[f"weight_hh_l{layer}{suffix}"] = u((4 * H, H))
            p[f"bias_ih_l{layer}{suffix}"] = u((4 * H,))
            p[f"bias_hh_l{layer}{suffix}"] = u((4 * H,))
    p["dense_w"] = u((H, 2 * H), 1.0 / ((2 * H) ** 0.5))
    p["dense_b"] = u((H,), 1.0 / ((2 * H) ** 0.5))
    p["out_proj_w"] = u((L, H), 1.0 / (H ** 0.5))
    p["out_proj_b"] = u((L,), 1.0 / (H ** 0.5))
    return p


# ------------------------- pure-JAX reference (check) -----------------------
def reference_forward(features, p, H):
    x = features.mean(axis=1)                            # (T, H)

    def run_dir(xs, wih, whh, bih, bhh, reverse):
        T = xs.shape[0]
        h = jnp.zeros((H,), jnp.float32)
        c = jnp.zeros((H,), jnp.float32)
        outs = [None] * T
        order = range(T - 1, -1, -1) if reverse else range(T)
        for t in order:
            z = wih @ xs[t] + bih + whh @ h + bhh
            i = jax.nn.sigmoid(z[0:H])
            f = jax.nn.sigmoid(z[H:2 * H])
            g = jnp.tanh(z[2 * H:3 * H])
            o = jax.nn.sigmoid(z[3 * H:4 * H])
            c = f * c + i * g
            h = o * jnp.tanh(c)
            outs[t] = h
        return jnp.stack(outs, axis=0)

    inp = x
    for layer in range(2):
        f = run_dir(inp, p[f"weight_ih_l{layer}"], p[f"weight_hh_l{layer}"],
                    p[f"bias_ih_l{layer}"], p[f"bias_hh_l{layer}"], False)
        b = run_dir(inp, p[f"weight_ih_l{layer}_reverse"],
                    p[f"weight_hh_l{layer}_reverse"],
                    p[f"bias_ih_l{layer}_reverse"],
                    p[f"bias_hh_l{layer}_reverse"], True)
        inp = jnp.concatenate([f, b], axis=1)             # (T, 2H)
    d = jnp.tanh(inp @ p["dense_w"].T + p["dense_b"])
    return d @ p["out_proj_w"].T + p["out_proj_b"]


if __name__ == "__main__":
    H, L = 32, 3
    key = jax.random.PRNGKey(0)
    kf, kp, kf2 = jax.random.split(key, 3)
    params = init_params(kp, H, L)
    lstm_slab, head_slab = pack_params(params, H, L)      # one-time packing

    # primary shape: batch=2, seq=8, hidden=32
    features = jax.random.normal(kf, (2, 8, H), jnp.float32)
    out = jax.block_until_ready(
        sentiment_head_forward(features, lstm_slab, head_slab, num_labels=L))
    assert out.shape == (2, L)
    ref = reference_forward(features, params, H)
    if not jnp.allclose(out, ref, rtol=1e-2, atol=1e-2):
        raise AssertionError("Pallas kernel mismatch vs reference (B=2)")

    # asymmetric second shape to exercise the fwd/bwd time-index mapping
    features2 = jax.random.normal(kf2, (5, 4, H), jnp.float32)
    out2 = jax.block_until_ready(
        sentiment_head_forward(features2, lstm_slab, head_slab, num_labels=L))
    ref2 = reference_forward(features2, params, H)
    if not jnp.allclose(out2, ref2, rtol=1e-2, atol=1e-2):
        raise AssertionError("Pallas kernel mismatch vs reference (B=5)")

    print("KERNEL_OK")
</pallas_src>

<mosaic_0001>
module attributes {stable_mosaic.version = 11 : i64} {
  func.func @head_kernel(%arg0: memref<2x8x32xf32, #tpu.memory_space<vmem>>, %arg1: memref<336x256xf32, #tpu.memory_space<vmem>>, %arg2: memref<264x128xf32, #tpu.memory_space<vmem>>, %arg3: memref<2x128xf32, #tpu.memory_space<vmem>>, %arg4: memref<2x64xf32, #tpu.memory_space<vmem>>, %arg5: memref<2x64xf32, #tpu.memory_space<vmem>>, %arg6: memref<2x64xf32, #tpu.memory_space<vmem>>, %arg7: memref<2x64xf32, #tpu.memory_space<vmem>>) attributes {dimension_semantics = [], scalar_prefetch = 0 : i64, scratch_operands = 4 : i64, tpu.core_type = #tpu.core_type<tc>} {
    %c0 = arith.constant 0 : index
    %c0_0 = arith.constant 0 : index
    %c0_1 = arith.constant 0 : index
    %0 = vector.load %arg0[%c0, %c0_0, %c0_1] : memref<2x8x32xf32, #tpu.memory_space<vmem>>, vector<2x8x32xf32>
    %cst = arith.constant dense<0.000000e+00> : vector<2x32xf32>
    %1 = vector.multi_reduction <add>, %0, %cst [1] : vector<2x8x32xf32> to vector<2x32xf32>
    %cst_2 = arith.constant 8.000000e+00 : f32
    %2 = vector.broadcast %cst_2 : f32 to vector<2x32xf32>
    %3 = arith.divf %1, %2 : vector<2x32xf32>
    %4 = vector.extract_strided_slice %3 {offsets = [1, 0], sizes = [1, 32], strides = [1, 1]} : vector<2x32xf32> to vector<1x32xf32>
    %5 = vector.extract_strided_slice %3 {offsets = [0, 0], sizes = [1, 32], strides = [1, 1]} : vector<2x32xf32> to vector<1x32xf32>
    %6 = tpu.concatenate %4, %5 in 0 : vector<1x32xf32>, vector<1x32xf32> -> vector<2x32xf32>
    %7 = tpu.iota {dimensions = array<i32: 1>} : vector<1x256xi32>
    %c128_i32 = arith.constant 128 : i32
    %8 = vector.broadcast %c128_i32 : i32 to vector<1x256xi32>
    %9 = arith.cmpi sge, %7, %8 : vector<1x256xi32>
    %c192_i32 = arith.constant 192 : i32
    %10 = vector.broadcast %c192_i32 : i32 to vector<1x256xi32>
    %11 = arith.cmpi slt, %7, %10 : vector<1x256xi32>
    %12 = arith.andi %9, %11 : vector<1x256xi1>
    %c0_3 = arith.constant 0 : index
    %c0_4 = arith.constant 0 : index
    %13 = vector.load %arg1[%c0_3, %c0_4] : memref<336x256xf32, #tpu.memory_space<vmem>>, vector<32x256xf32>
    %c32 = arith.constant 32 : index
    %c0_5 = arith.constant 0 : index
    %14 = vector.load %arg1[%c32, %c0_5] : memref<336x256xf32, #tpu.memory_space<vmem>>, vector<32x256xf32>
    %c64 = arith.constant 64 : index
    %c0_6 = arith.constant 0 : index
    %15 = vector.load %arg1[%c64, %c0_6] : memref<336x256xf32, #tpu.memory_space<vmem>>, vector<64x256xf32>
    %c128 = arith.constant 128 : index
    %c0_7 = arith.constant 0 : index
    %16 = vector.load %arg1[%c128, %c0_7] : memref<336x256xf32, #tpu.memory_space<vmem>>, vector<1x256xf32>
    %cst_8 = arith.constant dense<0.000000e+00> : vector<2x256xf32>
    %17 = tpu.matmul %3, %13, %cst_8 {dimension_numbers = #tpu.dot_dimension_numbers<[1], [0], [0], [1], [0, 0, 1, 1], [], []>} : vector<2x32xf32>, vector<32x256xf32>, vector<2x256xf32> -> vector<2x256xf32>
    %cst_9 = arith.constant dense<0.000000e+00> : vector<2x256xf32>
    %18 = tpu.matmul %6, %14, %cst_9 {dimension_numbers = #tpu.dot_dimension_numbers<[1], [0], [0], [1], [0, 0, 1, 1], [], []>} : vector<2x32xf32>, vector<32x256xf32>, vector<2x256xf32> -> vector<2x256xf32>
    %19 = arith.addf %17, %18 : vector<2x256xf32>
    %20 = vector.broadcast %16 : vector<1x256xf32> to vector<2x256xf32>
    %21 = arith.addf %19, %20 : vector<2x256xf32>
    %cst_10 = arith.constant 0.000000e+00 : f32
    %22 = vector.broadcast %cst_10 : f32 to vector<1x64xf32>
    %cst_11 = arith.constant 0.000000e+00 : f32
    %23 = vector.broadcast %cst_11 : f32 to vector<1x64xf32>
    %24 = vector.extract_strided_slice %21 {offsets = [0, 0], sizes = [1, 256], strides = [1, 1]} : vector<2x256xf32> to vector<1x256xf32>
    %cst_12 = arith.constant dense<0.000000e+00> : vector<1x256xf32>
    %25 = tpu.matmul %22, %15, %cst_12 {dimension_numbers = #tpu.dot_dimension_numbers<[1], [0], [0], [1], [0, 0, 1, 1], [], []>} : vector<1x64xf32>, vector<64x256xf32>, vector<1x256xf32> -> vector<1x256xf32>
    %26 = arith.addf %24, %25 : vector<1x256xf32>
    %cst_13 = arith.constant 5.000000e-01 : f32
    %27 = vector.broadcast %cst_13 : f32 to vector<1x256xf32>
    %28 = arith.mulf %27, %26 : vector<1x256xf32>
    %29 = arith.select %12, %26, %28 : vector<1x256xi1>, vector<1x256xf32>
    %30 = math.tanh %29 : vector<1x256xf32>
    %cst_14 = arith.constant 5.000000e-01 : f32
    %31 = vector.broadcast %cst_14 : f32 to vector<1x256xf32>
    %32 = arith.mulf %31, %30 : vector<1x256xf32>
    %cst_15 = arith.constant 5.000000e-01 : f32
    %33 = vector.broadcast %cst_15 : f32 to vector<1x256xf32>
    %34 = arith.addf %32, %33 : vector<1x256xf32>
    %35 = arith.select %12, %30, %34 : vector<1x256xi1>, vector<1x256xf32>
    %36 = vector.extract_strided_slice %35 {offsets = [0, 0], sizes = [1, 64], strides = [1, 1]} : vector<1x256xf32> to vector<1x64xf32>
    %37 = vector.extract_strided_slice %35 {offsets = [0, 64], sizes = [1, 64], strides = [1, 1]} : vector<1x256xf32> to vector<1x64xf32>
    %38 = vector.extract_strided_slice %35 {offsets = [0, 128], sizes = [1, 64], strides = [1, 1]} : vector<1x256xf32> to vector<1x64xf32>
    %39 = vector.extract_strided_slice %35 {offsets = [0, 192], sizes = [1, 64], strides = [1, 1]} : vector<1x256xf32> to vector<1x64xf32>
    %40 = arith.mulf %37, %23 : vector<1x64xf32>
    %41 = arith.mulf %36, %38 : vector<1x64xf32>
    %42 = arith.addf %40, %41 : vector<1x64xf32>
    %43 = math.tanh %42 : vector<1x64xf32>
    %44 = arith.mulf %39, %43 : vector<1x64xf32>
    %c0_16 = arith.constant 0 : index
    %c0_17 = arith.constant 0 : index
    %45 = vector.load %arg4[%c0_16, %c0_17] : memref<2x64xf32, #tpu.memory_space<vmem>>, vector<1x64xf32>
    tpu.vector_store %arg4[%c0_16, %c0_17], %44 {strides = array<i32>} : memref<2x64xf32, #tpu.memory_space<vmem>>, vector<1x64xf32>,
    %c1 = arith.constant 1 : index
    %c0_18 = arith.constant 0 : index
    %46 = vector.load %arg5[%c1, %c0_18] : memref<2x64xf32, #tpu.memory_space<vmem>>, vector<1x64xf32>
    tpu.vector_store %arg5[%c1, %c0_18], %44 {strides = array<i32>} : memref<2x64xf32, #tpu.memory_space<vmem>>, vector<1x64xf32>,
    %47 = vector.extract_strided_slice %21 {offsets = [1, 0], sizes = [1, 256], strides = [1, 1]} : vector<2x256xf32> to vector<1x256xf32>
    %cst_19 = arith.constant dense<0.000000e+00> : vector<1x256xf32>
    %48 = tpu.matmul %44, %15, %cst_19 {dimension_numbers = #tpu.dot_dimension_numbers<[1], [0], [0], [1], [0, 0, 1, 1], [], []>} : vector<1x64xf32>, vector<64x256xf32>, vector<1x256xf32> -> vector<1x256xf32>
    %49 = arith.addf %47, %48 : vector<1x256xf32>
    %cst_20 = arith.constant 5.000000e-01 : f32
    %50 = vector.broadcast %cst_20 : f32 to vector<1x256xf32>
    %51 = arith.mulf %50, %49 : vector<1x256xf32>
    %52 = arith.select %12, %49, %51 : vector<1x256xi1>, vector<1x256xf32>
    %53 = math.tanh %52 : vector<1x256xf32>
    %cst_21 = arith.constant 5.000000e-01 : f32
    %54 = vector.broadcast %cst_21 : f32 to vector<1x256xf32>
    %55 = arith.mulf %54, %53 : vector<1x256xf32>
    %cst_22 = arith.constant 5.000000e-01 : f32
    %56 = vector.broadcast %cst_22 : f32 to vector<1x256xf32>
    %57 = arith.addf %55, %56 : vector<1x256xf32>
    %58 = arith.select %12, %53, %57 : vector<1x256xi1>, vector<1x256xf32>
    %59 = vector.extract_strided_slice %58 {offsets = [0, 0], sizes = [1, 64], strides = [1, 1]} : vector<1x256xf32> to vector<1x64xf32>
    %60 = vector.extract_strided_slice %58 {offsets = [0, 64], sizes = [1, 64], strides = [1, 1]} : vector<1x256xf32> to vector<1x64xf32>
    %61 = vector.extract_strided_slice %58 {offsets = [0, 128], sizes = [1, 64], strides = [1, 1]} : vector<1x256xf32> to vector<1x64xf32>
    %62 = vector.extract_strided_slice %58 {offsets = [0, 192], sizes = [1, 64], strides = [1, 1]} : vector<1x256xf32> to vector<1x64xf32>
    %63 = arith.mulf %60, %42 : vector<1x64xf32>
    %64 = arith.mulf %59, %61 : vector<1x64xf32>
    %65 = arith.addf %63, %64 : vector<1x64xf32>
    %66 = math.tanh %65 : vector<1x64xf32>
    %67 = arith.mulf %62, %66 : vector<1x64xf32>
    %c1_23 = arith.constant 1 : index
    %c0_24 = arith.constant 0 : index
    %68 = vector.load %arg4[%c1_23, %c0_24] : memref<2x64xf32, #tpu.memory_space<vmem>>, vector<1x64xf32>
    tpu.vector_store %arg4[%c1_23, %c0_24], %67 {strides = array<i32>} : memref<2x64xf32, #tpu.memory_space<vmem>>, vector<1x64xf32>,
    %c0_25 = arith.constant 0 : index
    %c0_26 = arith.constant 0 : index
    %69 = vector.load %arg5[%c0_25, %c0_26] : memref<2x64xf32, #tpu.memory_space<vmem>>, vector<1x64xf32>
    tpu.vector_store %arg5[%c0_25, %c0_26], %67 {strides = array<i32>} : memref<2x64xf32, #tpu.memory_space<vmem>>, vector<1x64xf32>,
    %c0_27 = arith.constant 0 : index
    %c0_28 = arith.constant 0 : index
    %70 = vector.load %arg4[%c0_27, %c0_28] : memref<2x64xf32, #tpu.memory_space<vmem>>, vector<2x64xf32>
    %c0_29 = arith.constant 0 : index
    %c0_30 = arith.constant 0 : index
    %71 = vector.load %arg5[%c0_29, %c0_30] : memref<2x64xf32, #tpu.memory_space<vmem>>, vector<2x64xf32>
    %c136 = arith.constant 136 : index
    %c0_31 = arith.constant 0 : index
    %72 = vector.load %arg1[%c136, %c0_31] : memref<336x256xf32, #tpu.memory_space<vmem>>, vector<64x256xf32>
    %c200 = arith.constant 200 : index
    %c0_32 = arith.constant 0 : index
    %73 = vector.load %arg1[%c200, %c0_32] : memref<336x256xf32, #tpu.memory_space<vmem>>, vector<64x256xf32>
    %c264 = arith.constant 264 : index
    %c0_33 = arith.constant 0 : index
    %74 = vector.load %arg1[%c264, %c0_33] : memref<336x256xf32, #tpu.memory_space<vmem>>, vector<64x256xf32>
    %c328 = arith.constant 328 : index
    %c0_34 = arith.constant 0 : index
    %75 = vector.load %arg1[%c328, %c0_34] : memref<336x256xf32, #tpu.memory_space<vmem>>, vector<1x256xf32>
    %cst_35 = arith.constant dense<0.000000e+00> : vector<2x256xf32>
    %76 = tpu.matmul %70, %72, %cst_35 {dimension_numbers = #tpu.dot_dimension_numbers<[1], [0], [0], [1], [0, 0, 1, 1], [], []>} : vector<2x64xf32>, vector<64x256xf32>, vector<2x256xf32> -> vector<2x256xf32>
    %cst_36 = arith.constant dense<0.000000e+00> : vector<2x256xf32>
    %77 = tpu.matmul %71, %73, %cst_36 {dimension_numbers = #tpu.dot_dimension_numbers<[1], [0], [0], [1], [0, 0, 1, 1], [], []>} : vector<2x64xf32>, vector<64x256xf32>, vector<2x256xf32> -> vector<2x256xf32>
    %78 = arith.addf %76, %77 : vector<2x256xf32>
    %79 = vector.broadcast %75 : vector<1x256xf32> to vector<2x256xf32>
    %80 = arith.addf %78, %79 : vector<2x256xf32>
    %cst_37 = arith.constant 0.000000e+00 : f32
    %81 = vector.broadcast %cst_37 : f32 to vector<1x64xf32>
    %cst_38 = arith.constant 0.000000e+00 : f32
    %82 = vector.broadcast %cst_38 : f32 to vector<1x64xf32>
    %83 = vector.extract_strided_slice %80 {offsets = [0, 0], sizes = [1, 256], strides = [1, 1]} : vector<2x256xf32> to vector<1x256xf32>
    %cst_39 = arith.constant dense<0.000000e+00> : vector<1x256xf32>
    %84 = tpu.matmul %81, %74, %cst_39 {dimension_numbers = #tpu.dot_dimension_numbers<[1], [0], [0], [1], [0, 0, 1, 1], [], []>} : vector<1x64xf32>, vector<64x256xf32>, vector<1x256xf32> -> vector<1x256xf32>
    %85 = arith.addf %83, %84 : vector<1x256xf32>
    %cst_40 = arith.constant 5.000000e-01 : f32
    %86 = vector.broadcast %cst_40 : f32 to vector<1x256xf32>
    %87 = arith.mulf %86, %85 : vector<1x256xf32>
    %88 = arith.select %12, %85, %87 : vector<1x256xi1>, vector<1x256xf32>
    %89 = math.tanh %88 : vector<1x256xf32>
    %cst_41 = arith.constant 5.000000e-01 : f32
    %90 = vector.broadcast %cst_41 : f32 to vector<1x256xf32>
    %91 = arith.mulf %90, %89 : vector<1x256xf32>
    %cst_42 = arith.constant 5.000000e-01 : f32
    %92 = vector.broadcast %cst_42 : f32 to vector<1x256xf32>
    %93 = arith.addf %91, %92 : vector<1x256xf32>
    %94 = arith.select %12, %89, %93 : vector<1x256xi1>, vector<1x256xf32>
    %95 = vector.extract_strided_slice %94 {offsets = [0, 0], sizes = [1, 64], strides = [1, 1]} : vector<1x256xf32> to vector<1x64xf32>
    %96 = vector.extract_strided_slice %94 {offsets = [0, 64], sizes = [1, 64], strides = [1, 1]} : vector<1x256xf32> to vector<1x64xf32>
    %97 = vector.extract_strided_slice %94 {offsets = [0, 128], sizes = [1, 64], strides = [1, 1]} : vector<1x256xf32> to vector<1x64xf32>
    %98 = vector.extract_strided_slice %94 {offsets = [0, 192], sizes = [1, 64], strides = [1, 1]} : vector<1x256xf32> to vector<1x64xf32>
    %99 = arith.mulf %96, %82 : vector<1x64xf32>
    %100 = arith.mulf %95, %97 : vector<1x64xf32>
    %101 = arith.addf %99, %100 : vector<1x64xf32>
    %102 = math.tanh %101 : vector<1x64xf32>
    %103 = arith.mulf %98, %102 : vector<1x64xf32>
    %c0_43 = arith.constant 0 : index
    %c0_44 = arith.constant 0 : index
    %104 = vector.load %arg6[%c0_43, %c0_44] : memref<2x64xf32, #tpu.memory_space<vmem>>, vector<1x64xf32>
    tpu.vector_store %arg6[%c0_43, %c0_44], %103 {strides = array<i32>} : memref<2x64xf32, #tpu.memory_space<vmem>>, vector<1x64xf32>,
    %c1_45 = arith.constant 1 : index
    %c0_46 = arith.constant 0 : index
    %105 = vector.load %arg7[%c1_45, %c0_46] : memref<2x64xf32, #tpu.memory_space<vmem>>, vector<1x64xf32>
    tpu.vector_store %arg7[%c1_45, %c0_46], %103 {strides = array<i32>} : memref<2x64xf32, #tpu.memory_space<vmem>>, vector<1x64xf32>,
    %106 = vector.extract_strided_slice %80 {offsets = [1, 0], sizes = [1, 256], strides = [1, 1]} : vector<2x256xf32> to vector<1x256xf32>
    %cst_47 = arith.constant dense<0.000000e+00> : vector<1x256xf32>
    %107 = tpu.matmul %103, %74, %cst_47 {dimension_numbers = #tpu.dot_dimension_numbers<[1], [0], [0], [1], [0, 0, 1, 1], [], []>} : vector<1x64xf32>, vector<64x256xf32>, vector<1x256xf32> -> vector<1x256xf32>
    %108 = arith.addf %106, %107 : vector<1x256xf32>
    %cst_48 = arith.constant 5.000000e-01 : f32
    %109 = vector.broadcast %cst_48 : f32 to vector<1x256xf32>
    %110 = arith.mulf %109, %108 : vector<1x256xf32>
    %111 = arith.select %12, %108, %110 : vector<1x256xi1>, vector<1x256xf32>
    %112 = math.tanh %111 : vector<1x256xf32>
    %cst_49 = arith.constant 5.000000e-01 : f32
    %113 = vector.broadcast %cst_49 : f32 to vector<1x256xf32>
    %114 = arith.mulf %113, %112 : vector<1x256xf32>
    %cst_50 = arith.constant 5.000000e-01 : f32
    %115 = vector.broadcast %cst_50 : f32 to vector<1x256xf32>
    %116 = arith.addf %114, %115 : vector<1x256xf32>
    %117 = arith.select %12, %112, %116 : vector<1x256xi1>, vector<1x256xf32>
    %118 = vector.extract_strided_slice %117 {offsets = [0, 0], sizes = [1, 64], strides = [1, 1]} : vector<1x256xf32> to vector<1x64xf32>
    %119 = vector.extract_strided_slice %117 {offsets = [0, 64], sizes = [1, 64], strides = [1, 1]} : vector<1x256xf32> to vector<1x64xf32>
    %120 = vector.extract_strided_slice %117 {offsets = [0, 128], sizes = [1, 64], strides = [1, 1]} : vector<1x256xf32> to vector<1x64xf32>
    %121 = vector.extract_strided_slice %117 {offsets = [0, 192], sizes = [1, 64], strides = [1, 1]} : vector<1x256xf32> to vector<1x64xf32>
    %122 = arith.mulf %119, %101 : vector<1x64xf32>
    %123 = arith.mulf %118, %120 : vector<1x64xf32>
    %124 = arith.addf %122, %123 : vector<1x64xf32>
    %125 = math.tanh %124 : vector<1x64xf32>
    %126 = arith.mulf %121, %125 : vector<1x64xf32>
    %c1_51 = arith.constant 1 : index
    %c0_52 = arith.constant 0 : index
    %127 = vector.load %arg6[%c1_51, %c0_52] : memref<2x64xf32, #tpu.memory_space<vmem>>, vector<1x64xf32>
    tpu.vector_store %arg6[%c1_51, %c0_52], %126 {strides = array<i32>} : memref<2x64xf32, #tpu.memory_space<vmem>>, vector<1x64xf32>,
    %c0_53 = arith.constant 0 : index
    %c0_54 = arith.constant 0 : index
    %128 = vector.load %arg7[%c0_53, %c0_54] : memref<2x64xf32, #tpu.memory_space<vmem>>, vector<1x64xf32>
    tpu.vector_store %arg7[%c0_53, %c0_54], %126 {strides = array<i32>} : memref<2x64xf32, #tpu.memory_space<vmem>>, vector<1x64xf32>,
    %c0_55 = arith.constant 0 : index
    %c0_56 = arith.constant 0 : index
    %129 = vector.load %arg6[%c0_55, %c0_56] : memref<2x64xf32, #tpu.memory_space<vmem>>, vector<2x64xf32>
    %c0_57 = arith.constant 0 : index
    %c0_58 = arith.constant 0 : index
    %130 = vector.load %arg7[%c0_57, %c0_58] : memref<2x64xf32, #tpu.memory_space<vmem>>, vector<2x64xf32>
    %c0_59 = arith.constant 0 : index
    %c0_60 = arith.constant 0 : index
    %131 = vector.load %arg2[%c0_59, %c0_60] : memref<264x128xf32, #tpu.memory_space<vmem>>, vector<64x128xf32>
    %c64_61 = arith.constant 64 : index
    %c0_62 = arith.constant 0 : index
    %132 = vector.load %arg2[%c64_61, %c0_62] : memref<264x128xf32, #tpu.memory_space<vmem>>, vector<64x128xf32>
    %c128_63 = arith.constant 128 : index
    %c0_64 = arith.constant 0 : index
    %133 = vector.load %arg2[%c128_63, %c0_64] : memref<264x128xf32, #tpu.memory_space<vmem>>, vector<128x128xf32>
    %c256 = arith.constant 256 : index
    %c0_65 = arith.constant 0 : index
    %134 = vector.load %arg2[%c256, %c0_65] : memref<264x128xf32, #tpu.memory_space<vmem>>, vector<1x128xf32>
    %c257 = arith.constant 257 : index
    %c0_66 = arith.constant 0 : index
    %135 = vector.load %arg2[%c257, %c0_66] : memref<264x128xf32, #tpu.memory_space<vmem>>, vector<1x128xf32>
    %cst_67 = arith.constant dense<0.000000e+00> : vector<2x128xf32>
    %136 = tpu.matmul %129, %131, %cst_67 {dimension_numbers = #tpu.dot_dimension_numbers<[1], [0], [0], [1], [0, 0, 1, 1], [], []>} : vector<2x64xf32>, vector<64x128xf32>, vector<2x128xf32> -> vector<2x128xf32>
    %cst_68 = arith.constant dense<0.000000e+00> : vector<2x128xf32>
    %137 = tpu.matmul %130, %132, %cst_68 {dimension_numbers = #tpu.dot_dimension_numbers<[1], [0], [0], [1], [0, 0, 1, 1], [], []>} : vector<2x64xf32>, vector<64x128xf32>, vector<2x128xf32> -> vector<2x128xf32>
    %138 = arith.addf %136, %137 : vector<2x128xf32>
    %139 = vector.broadcast %134 : vector<1x128xf32> to vector<2x128xf32>
    %140 = arith.addf %138, %139 : vector<2x128xf32>
    %141 = math.tanh %140 : vector<2x128xf32>
    %cst_69 = arith.constant dense<0.000000e+00> : vector<2x128xf32>
    %142 = tpu.matmul %141, %133, %cst_69 {dimension_numbers = #tpu.dot_dimension_numbers<[1], [0], [0], [1], [0, 0, 1, 1], [], []>} : vector<2x128xf32>, vector<128x128xf32>, vector<2x128xf32> -> vector<2x128xf32>
    %143 = vector.broadcast %135 : vector<1x128xf32> to vector<2x128xf32>
    %144 = arith.addf %142, %143 : vector<2x128xf32>
    %c0_70 = arith.constant 0 : index
    %c0_71 = arith.constant 0 : index
    %145 = vector.load %arg3[%c0_70, %c0_71] : memref<2x128xf32, #tpu.memory_space<vmem>>, vector<2x128xf32>
    tpu.vector_store %arg3[%c0_70, %c0_71], %144 {strides = array<i32>} : memref<2x128xf32, #tpu.memory_space<vmem>>, vector<2x128xf32>,
    return
  }
}

</mosaic_0001>

<llo_original>
// kernel: sentiment_head_forward.1
$region0: #{sentiment_head_forward.1}
  #allocation0 [shape = 'u32[]', space=smem, size = 0x4, offset = 0x4, fixed_abs, tag = 'smem constant byte address 0x4 - core index']
  #allocation1 [shape = 'u32[72,128]{1,0:T(1,128)}', space=vmem, size = 0x9000, scoped, tag = 'internal scratch']
  #allocation2 [shape = 'f32[2,64]{1,0:T(2,128)}', space=vmem, size = 0x400, scoped, tag = 'scratch operand']
  #allocation3 [shape = 'f32[2,64]{1,0:T(2,128)}', space=vmem, size = 0x400, scoped, tag = 'scratch operand']
  #allocation4 [shape = 'f32[2,64]{1,0:T(2,128)}', space=vmem, size = 0x400, scoped, tag = 'scratch operand']
  #allocation5 [shape = 'f32[2,64]{1,0:T(2,128)}', space=vmem, size = 0x400, scoped, tag = 'scratch operand']
  %s0 = inlined_call_operand.hbm [shape: f32[2,8,32], index: 0, kind: input, shape index: {}]
  %s1 = inlined_call_operand.hbm [shape: f32[336,256], index: 1, kind: input, shape index: {}]
  %s2 = inlined_call_operand.hbm [shape: f32[264,128], index: 2, kind: input, shape index: {}]
  %s3 = inlined_call_operand.hbm [shape: f32[2,128], index: 3, kind: output, shape index: {}]
  %s4 = sld [smem:[#allocation0]]
  $region34: #{sentiment_head_forward.1} parent=0
    _
  %s6 = ssub.s32 1, %s4
  %s7 = scalar_select 0, %s6, %s4
  $region1: #{sentiment_head_forward.1} parent=0
    #allocation6 [shape = 'u8[8192]{0}', space=vmem, size = 0x2000, scoped, tag = 'input window, operand 0, single buffered']
    #allocation7 [shape = 's32[1]{0}', space=sflag, size = 0x4, scoped, tag = 'scoped memory for sentiment_head_forward.1']
    #allocation8 [shape = 's32[1]{0}', space=sflag, size = 0x4, scoped, tag = 'scoped memory for sentiment_head_forward.1']
    #allocation9 [shape = 'u8[344064]{0}', space=vmem, size = 0x54000, scoped, tag = 'input window, operand 1, single buffered']
    #allocation10 [shape = 's32[1]{0}', space=sflag, size = 0x4, scoped, tag = 'scoped memory for sentiment_head_forward.1']
    #allocation11 [shape = 'u8[135168]{0}', space=vmem, size = 0x21000, scoped, tag = 'input window, operand 2, single buffered']
    #allocation12 [shape = 'u8[1024]{0}', space=vmem, size = 0x400, scoped, tag = 'output window, operand 0, single buffered']
    %8 = vsyncpa [#allocation7], 0
    %9 = vsyncpa [#allocation10], 0
    %10 = vsyncpa [#allocation8], 0
    // Predicated region
    $region2: #{sentiment_head_forward.1} parent=1 // pred_check
      _
    $region3: #{sentiment_head_forward.1} parent=1 // pred_check_branch
      %12 = sbr.rel (0) target = $region5
    $region4: #{sentiment_head_forward.1} parent=1 // pred_region
      %14 = vsyncadd [#allocation7], 0
      %s15 = sshll.u32 %s0, 4
      %s16 = int_to_ptr.hbm [resolvable:$true] %s15
      %s17 = sshll.u32 [#allocation6], 4
      %s18 = int_to_ptr.vmem [resolvable:$true] %s17
      %23 = dma.hbm_to_vmem [thread:$0]  %s16, 256, %s18, [#allocation7], 128, 128, 8
    $region5: #{sentiment_head_forward.1} parent=1 // pred_fallthru
      _
    // Predicated region
    $region6: #{sentiment_head_forward.1} parent=1 // pred_check
      _
    $region7: #{sentiment_head_forward.1} parent=1 // pred_check_branch
      %25 = sbr.rel (0) target = $region9
    $region8: #{sentiment_head_forward.1} parent=1 // pred_region
      %27 = vsyncadd [#allocation10], 0
      %s28 = sshll.u32 %s1, 4
      %s29 = int_to_ptr.hbm [resolvable:$true] %s28
      %s30 = sshll.u32 [#allocation9], 4
      %s31 = int_to_ptr.vmem [resolvable:$true] %s30
      %36 = dma.hbm_to_vmem [thread:$0]  %s29, 10752, %s31, [#allocation10], 256, 256, 16
    $region9: #{sentiment_head_forward.1} parent=1 // pred_fallthru
      _
    // Predicated region
    $region10: #{sentiment_head_forward.1} parent=1 // pred_check
      _
    $region11: #{sentiment_head_forward.1} parent=1 // pred_check_branch
      %38 = sbr.rel (0) target = $region13
    $region12: #{sentiment_head_forward.1} parent=1 // pred_region
      %40 = vsyncadd [#allocation10], 0
      %s41 = sshll.u32 %s2, 4
      %s42 = int_to_ptr.hbm [resolvable:$true] %s41
      %s43 = sshll.u32 [#allocation11], 4
      %s44 = int_to_ptr.vmem [resolvable:$true] %s43
      %49 = dma.hbm_to_vmem [thread:$0]  %s42, 4224, %s44, [#allocation10], 128, 128, 8
    $region13: #{sentiment_head_forward.1} parent=1 // pred_fallthru
      _
    // Predicated region
    $region14: #{sentiment_head_forward.1} parent=1 // pred_check
      _
    $region15: #{sentiment_head_forward.1} parent=1 // pred_check_branch
      %51 = sbr.rel (0) target = $region17
    $region16: #{sentiment_head_forward.1} parent=1 // pred_region
      %53 = dma.done [#allocation7], 256
    $region17: #{sentiment_head_forward.1} parent=1 // pred_fallthru
      _
    // Predicated region
    $region18: #{sentiment_head_forward.1} parent=1 // pred_check
      _
    $region19: #{sentiment_head_forward.1} parent=1 // pred_check_branch
      %55 = sbr.rel (0) target = $region21
    $region20: #{sentiment_head_forward.1} parent=1 // pred_region
      %57 = dma.done [#allocation10], 10752
    $region21: #{sentiment_head_forward.1} parent=1 // pred_fallthru
      _
    // Predicated region
    $region22: #{sentiment_head_forward.1} parent=1 // pred_check
      _
    $region23: #{sentiment_head_forward.1} parent=1 // pred_check_branch
      %59 = sbr.rel (0) target = $region25
    $region24: #{sentiment_head_forward.1} parent=1 // pred_region
      %61 = dma.done [#allocation10], 4224
    $region25: #{sentiment_head_forward.1} parent=1 // pred_fallthru
      _
    %v62 = vld [vmem:[#allocation6] sm:$0xff]
    %v63 = vld [vmem:[#allocation6 + $0x8] sm:$0xff]
    %vm64 = vcmask 261120
    %v65 = vsel %vm64, %v62, 0.0
    %v66 = vrot.slane %v65, 4
    %v67 = vadd.f32 %v65, %v66
    %v68 = vrot.slane %v67, 2
    %v69 = vadd.f32 %v67, %v68
    %v70 = vrot.slane %v69, 1
    %v71 = vadd.f32 %v69, %v70
    %v72 = vsel %vm64, %v63, 0.0
    %v73 = vrot.slane %v72, 4
    %v74 = vadd.f32 %v72, %v73
    %v75 = vrot.slane %v74, 2
    %v76 = vadd.f32 %v74, %v75
    %v77 = vrot.slane %v76, 1
    %v78 = vadd.f32 %v76, %v77
    %v79 = vrcp.pop 8.0
    %v80 = vmul.f32 8.0, %v79
    %v81 = vsub.f32 1.0, %v80
    %v82 = vmul.f32 %v79, %v81
    %v83 = vadd.f32 %v79, %v82
    %vm84 = vweird.f32 %v79
    %v85 = vsel %vm84, %v79, %v83
    %v86 = vmul.f32 %v71, %v85
    %v87 = vmul.f32 %v78, %v85
    %vm88 = vcmask 1040384
    %v89 = vsel %vm88, %v87, %v86
    %v90 = vlaneseq
    %v91 = vand.u32 %v90, 127
    %v92 = vadd.s32 %v91, 128
    %vm93 = vcmp.ge.s32.totalorder %v91, 128
    %vm94 = vcmp.ge.s32.totalorder %v92, 128
    %vm95 = vcmp.lt.s32.totalorder %v91, 192
    %vm96 = vcmp.lt.s32.totalorder %v92, 192
    %vm97 = vmand %vm93, %vm95
    %vm98 = vmand %vm94, %vm96
    %v99 = vld [vmem:[#allocation9] sm:$0xff]
    %v100 = vld [vmem:[#allocation9 + $0x8] sm:$0xff]
    %v101 = vld [vmem:[#allocation9 + $0x10] sm:$0xff]
    %v102 = vld [vmem:[#allocation9 + $0x18] sm:$0xff]
    %v103 = vld [vmem:[#allocation9 + $0x20] sm:$0xff]
    %v104 = vld [vmem:[#allocation9 + $0x28] sm:$0xff]
    %v105 = vld [vmem:[#allocation9 + $0x30] sm:$0xff]
    %v106 = vld [vmem:[#allocation9 + $0x38] sm:$0xff]
    %v107 = vld [vmem:[#allocation9 + $0x40] sm:$0xff]
    %v108 = vld [vmem:[#allocation9 + $0x48] sm:$0xff]
    %v109 = vld [vmem:[#allocation9 + $0x50] sm:$0xff]
    %v110 = vld [vmem:[#allocation9 + $0x58] sm:$0xff]
    %v111 = vld [vmem:[#allocation9 + $0x60] sm:$0xff]
    %v112 = vld [vmem:[#allocation9 + $0x68] sm:$0xff]
    %v113 = vld [vmem:[#allocation9 + $0x70] sm:$0xff]
    %v114 = vld [vmem:[#allocation9 + $0x78] sm:$0xff]
    %v115 = vld [vmem:[#allocation9 + $0x80] sm:$0xff]
    %v116 = vld [vmem:[#allocation9 + $0x88] sm:$0xff]
    %v117 = vld [vmem:[#allocation9 + $0x90] sm:$0xff]
    %v118 = vld [vmem:[#allocation9 + $0x98] sm:$0xff]
    %v119 = vld [vmem:[#allocation9 + $0xa0] sm:$0xff]
    %v120 = vld [vmem:[#allocation9 + $0xa8] sm:$0xff]
    %v121 = vld [vmem:[#allocation9 + $0xb0] sm:$0xff]
    %v122 = vld [vmem:[#allocation9 + $0xb8] sm:$0xff]
    %v123 = vld [vmem:[#allocation9 + $0xc0] sm:$0xff]
    %v124 = vld [vmem:[#allocation9 + $0xc8] sm:$0xff]
    %v125 = vld [vmem:[#allocation9 + $0xd0] sm:$0xff]
    %v126 = vld [vmem:[#allocation9 + $0xd8] sm:$0xff]
    %v127 = vld [vmem:[#allocation9 + $0xe0] sm:$0xff]
    %v128 = vld [vmem:[#allocation9 + $0xe8] sm:$0xff]
    %v129 = vld [vmem:[#allocation9 + $0xf0] sm:$0xff]
    %v130 = vld [vmem:[#allocation9 + $0xf8] sm:$0xff]
    %s131 = scalar_lea.vmem [#allocation9], 256
    %v132 = vld [vmem:[%s131] ss:$8 sm:$0x3]
    %v134 = vsel %vm64, %v89, 0
    %136 = vmatpush.msra.mxu0 0.0
    %137 = vmatpush.msra.mxu0 0.0
    %138 = vmatpush.msra.mxu0 0.0
    %139 = vmatpush.msra.mxu0 0.0
    %140 = vmatpush.msra.mxu0 0.0
    %141 = vmatpush.msra.mxu0 0.0
    %142 = vmatpush.msra.mxu0 0.0
    %143 = vmatpush.msra.mxu0 0.0
    %144 = vmatpush.msra.mxu0 0.0
    %145 = vmatpush.msra.mxu0 0.0
    %146 = vmatpush.msra.mxu0 0.0
    %147 = vmatpush.msra.mxu0 0.0
    %148 = vmatpush.msra.mxu0 %v113
    %149 = vmatpush.msra.mxu0 %v111
    %150 = vmatpush.msra.mxu0 %v109
    %151 = vmatpush.msra.mxu0 %v107
    %152 = vmatmul.f32.gmra.mxu0 %v134
    %v153 = vpop.f32.mrf.mxu0
    %v154 = vadd.f32 0.0, %v153
    %155 = vdwg.mxu0
    %156 = vmatpush.msra.mxu0 0.0
    %157 = vmatpush.msra.mxu0 0.0
    %158 = vmatpush.msra.mxu0 0.0
    %159 = vmatpush.msra.mxu0 0.0
    %160 = vmatpush.msra.mxu0 0.0
    %161 = vmatpush.msra.mxu0 0.0
    %162 = vmatpush.msra.mxu0 0.0
    %163 = vmatpush.msra.mxu0 0.0
    %164 = vmatpush.msra.mxu0 0.0
    %165 = vmatpush.msra.mxu0 0.0
    %166 = vmatpush.msra.mxu0 0.0
    %167 = vmatpush.msra.mxu0 0.0
    %168 = vmatpush.msra.mxu0 %v114
    %169 = vmatpush.msra.mxu0 %v112
    %170 = vmatpush.msra.mxu0 %v110
    %171 = vmatpush.msra.mxu0 %v108
    %172 = vmatmul.f32.gmra.mxu0 %v134
    %v173 = vpop.f32.mrf.mxu0
    %v174 = vadd.f32 0.0, %v173
    %175 = vdwg.mxu0
    %vm178 = vcmask 1041409
    %v179 = vsel %vm178, %v87, %v86
    %v180 = vsel %vm64, %v179, 0
    %182 = vmatpush.msra.mxu0 0.0
    %183 = vmatpush.msra.mxu0 0.0
    %184 = vmatpush.msra.mxu0 0.0
    %185 = vmatpush.msra.mxu0 0.0
    %186 = vmatpush.msra.mxu0 0.0
    %187 = vmatpush.msra.mxu0 0.0
    %188 = vmatpush.msra.mxu0 0.0
    %189 = vmatpush.msra.mxu0 0.0
    %190 = vmatpush.msra.mxu0 0.0
    %191 = vmatpush.msra.mxu0 0.0
    %192 = vmatpush.msra.mxu0 0.0
    %193 = vmatpush.msra.mxu0 0.0
    %194 = vmatpush.msra.mxu0 %v105
    %195 = vmatpush.msra.mxu0 %v103
    %196 = vmatpush.msra.mxu0 %v101
    %197 = vmatpush.msra.mxu0 %v99
    %198 = vmatmul.f32.gmra.mxu0 %v180
    %v199 = vpop.f32.mrf.mxu0
    %v200 = vadd.f32 %v154, %v199
    %201 = vdwg.mxu0
    %202 = vmatpush.msra.mxu0 0.0
    %203 = vmatpush.msra.mxu0 0.0
    %204 = vmatpush.msra.mxu0 0.0
    %205 = vmatpush.msra.mxu0 0.0
    %206 = vmatpush.msra.mxu0 0.0
    %207 = vmatpush.msra.mxu0 0.0
    %208 = vmatpush.msra.mxu0 0.0
    %209 = vmatpush.msra.mxu0 0.0
    %210 = vmatpush.msra.mxu0 0.0
    %211 = vmatpush.msra.mxu0 0.0
    %212 = vmatpush.msra.mxu0 0.0
    %213 = vmatpush.msra.mxu0 0.0
    %214 = vmatpush.msra.mxu0 %v106
    %215 = vmatpush.msra.mxu0 %v104
    %216 = vmatpush.msra.mxu0 %v102
    %217 = vmatpush.msra.mxu0 %v100
    %218 = vmatmul.f32.gmra.mxu0 %v180
    %v219 = vpop.f32.mrf.mxu0
    %v220 = vadd.f32 %v174, %v219
    %221 = vdwg.mxu0
    %v223 = vperm.slane %v132, 0
    %v224 = vperm.slane %v132, 1
    %v227 = vadd.f32 %v200, %v223
    %v228 = vadd.f32 %v220, %v224
    %vm229 = vcmask 523264
    %v231 = vsel %vm229, 0.0, 0
    %233 = vmatpush.msra.mxu0 0.0
    %234 = vmatpush.msra.mxu0 0.0
    %235 = vmatpush.msra.mxu0 0.0
    %236 = vmatpush.msra.mxu0 0.0
    %237 = vmatpush.msra.mxu0 0.0
    %238 = vmatpush.msra.mxu0 0.0
    %239 = vmatpush.msra.mxu0 0.0
    %240 = vmatpush.msra.mxu0 0.0
    %241 = vmatpush.msra.mxu0 %v129
    %242 = vmatpush.msra.mxu0 %v127
    %243 = vmatpush.msra.mxu0 %v125
    %244 = vmatpush.msra.mxu0 %v123
    %245 = vmatpush.msra.mxu0 %v121
    %246 = vmatpush.msra.mxu0 %v119
    %247 = vmatpush.msra.mxu0 %v117
    %248 = vmatpush.msra.mxu0 %v115
    %249 = vmatmul.f32.gmra.mxu0 %v231
    %v250 = vpop.f32.mrf.mxu0
    %v251 = vadd.f32 0.0, %v250
    %252 = vdwg.mxu0
    %253 = vmatpush.msra.mxu0 0.0
    %254 = vmatpush.msra.mxu0 0.0
    %255 = vmatpush.msra.mxu0 0.0
    %256 = vmatpush.msra.mxu0 0.0
    %257 = vmatpush.msra.mxu0 0.0
    %258 = vmatpush.msra.mxu0 0.0
    %259 = vmatpush.msra.mxu0 0.0
    %260 = vmatpush.msra.mxu0 0.0
    %261 = vmatpush.msra.mxu0 %v130
    %262 = vmatpush.msra.mxu0 %v128
    %263 = vmatpush.msra.mxu0 %v126
    %264 = vmatpush.msra.mxu0 %v124
    %265 = vmatpush.msra.mxu0 %v122
    %266 = vmatpush.msra.mxu0 %v120
    %267 = vmatpush.msra.mxu0 %v118
    %268 = vmatpush.msra.mxu0 %v116
    %269 = vmatmul.f32.gmra.mxu0 %v231
    %v270 = vpop.f32.mrf.mxu0
    %v271 = vadd.f32 0.0, %v270
    %272 = vdwg.mxu0
    %v273 = vadd.f32 %v227, %v251
    %v274 = vadd.f32 %v228, %v271
    %v275 = vmul.f32 %v273, 0.5
    %v276 = vmul.f32 %v274, 0.5
    %v277 = vsel %vm97, %v273, %v275
    %v278 = vsel %vm98, %v274, %v276
    %v279 = vtanh.pop %v277
    %v280 = vtanh.pop %v278
    %v281 = vmul.f32 %v279, 0.5
    %v282 = vmul.f32 %v280, 0.5
    %v283 = vadd.f32 %v281, 0.5
    %v284 = vadd.f32 %v282, 0.5
    %v285 = vsel %vm97, %v279, %v283
    %v286 = vsel %vm98, %v280, %v284
    %v287 = vmul.f32 %v285, 0.0
    %v288 = vmul.f32 %v285, %v286
    %290 = vrot.lane.b32.xlu0 %v288, 64
    %v291 = vpop.permute.xlu0 %290
    %v293 = vadd.f32 %v287, %v291
    %v294 = vtanh.pop %v293
    %v295 = vmul.f32 %v286, %v294
    %297 = vrot.lane.b32.xlu0 %v295, 64
    %v298 = vpop.permute.xlu0 %297
    %vm300 = vcmask 516096
    %301 = vst.msk [vmem:[#allocation2] sm:$0x1] %vm300, %v298
    %302 = vst.msk [vmem:[#allocation3 + $0x1] sm:$0x1] %vm300, %v298
    %v303 = vsel %vm229, %v298, 0
    %305 = vmatpush.msra.mxu0 0.0
    %306 = vmatpush.msra.mxu0 0.0
    %307 = vmatpush.msra.mxu0 0.0
    %308 = vmatpush.msra.mxu0 0.0
    %309 = vmatpush.msra.mxu0 0.0
    %310 = vmatpush.msra.mxu0 0.0
    %311 = vmatpush.msra.mxu0 0.0
    %312 = vmatpush.msra.mxu0 0.0
    %313 = vmatpush.msra.mxu0 %v129
    %314 = vmatpush.msra.mxu0 %v127
    %315 = vmatpush.msra.mxu0 %v125
    %316 = vmatpush.msra.mxu0 %v123
    %317 = vmatpush.msra.mxu0 %v121
    %318 = vmatpush.msra.mxu0 %v119
    %319 = vmatpush.msra.mxu0 %v117
    %320 = vmatpush.msra.mxu0 %v115
    %321 = vmatmul.f32.gmra.mxu0 %v303
    %v322 = vpop.f32.mrf.mxu0
    %v323 = vadd.f32 0.0, %v322
    %324 = vdwg.mxu0
    %325 = vmatpush.msra.mxu0 0.0
    %326 = vmatpush.msra.mxu0 0.0
    %327 = vmatpush.msra.mxu0 0.0
    %328 = vmatpush.msra.mxu0 0.0
    %329 = vmatpush.msra.mxu0 0.0
    %330 = vmatpush.msra.mxu0 0.0
    %331 = vmatpush.msra.mxu0 0.0
    %332 = vmatpush.msra.mxu0 0.0
    %333 = vmatpush.msra.mxu0 %v130
    %334 = vmatpush.msra.mxu0 %v128
    %335 = vmatpush.msra.mxu0 %v126
    %336 = vmatpush.msra.mxu0 %v124
    %337 = vmatpush.msra.mxu0 %v122
    %338 = vmatpush.msra.mxu0 %v120
    %339 = vmatpush.msra.mxu0 %v118
    %340 = vmatpush.msra.mxu0 %v116
    %341 = vmatmul.f32.gmra.mxu0 %v303
    %v342 = vpop.f32.mrf.mxu0
    %v343 = vadd.f32 0.0, %v342
    %344 = vdwg.mxu0
    %v347 = vrot.slane %v323, 7
    %v348 = vrot.slane %v343, 7
    %v351 = vadd.f32 %v227, %v347
    %v352 = vadd.f32 %v228, %v348
    %v353 = vmul.f32 %v351, 0.5
    %v354 = vmul.f32 %v352, 0.5
    %v355 = vsel %vm97, %v351, %v353
    %v356 = vsel %vm98, %v352, %v354
    %v357 = vtanh.pop %v355
    %v358 = vtanh.pop %v356
    %v359 = vmul.f32 %v357, 0.5
    %v360 = vmul.f32 %v358, 0.5
    %v361 = vadd.f32 %v359, 0.5
    %v362 = vadd.f32 %v360, 0.5
    %v363 = vsel %vm97, %v357, %v361
    %v364 = vsel %vm98, %v358, %v362
    %v366 = vrot.slane %v293, 7
    %v368 = vmul.f32 %v363, %v366
    %v369 = vmul.f32 %v363, %v364
    %371 = vrot.lane.b32.xlu0 %v369, 64
    %v372 = vpop.permute.xlu0 %371
    %v374 = vadd.f32 %v368, %v372
    %v375 = vtanh.pop %v374
    %v376 = vmul.f32 %v364, %v375
    %378 = vrot.lane.b32.xlu0 %v376, 64
    %v379 = vpop.permute.xlu0 %378
    %vm381 = vcmask 517121
    %382 = vst.msk [vmem:[#allocation2] sm:$0x2] %vm381, %v379
    %383 = vst.msk [vmem:[#allocation3 - $0x1] sm:$0x2] %vm381, %v379
    %v384 = vld [vmem:[#allocation2] sm:$0x3]
    %v385 = vld [vmem:[#allocation3] sm:$0x3]
    %v386 = vld [vmem:[#allocation9 + $0x110] sm:$0xff]
    %v387 = vld [vmem:[#allocation9 + $0x118] sm:$0xff]
    %v388 = vld [vmem:[#allocation9 + $0x120] sm:$0xff]
    %v389 = vld [vmem:[#allocation9 + $0x128] sm:$0xff]
    %v390 = vld [vmem:[#allocation9 + $0x130] sm:$0xff]
    %v391 = vld [vmem:[#allocation9 + $0x138] sm:$0xff]
    %v392 = vld [vmem:[#allocation9 + $0x140] sm:$0xff]
    %v393 = vld [vmem:[#allocation9 + $0x148] sm:$0xff]
    %v394 = vld [vmem:[#allocation9 + $0x150] sm:$0xff]
    %v395 = vld [vmem:[#allocation9 + $0x158] sm:$0xff]
    %v396 = vld [vmem:[#allocation9 + $0x160] sm:$0xff]
    %v397 = vld [vmem:[#allocation9 + $0x168] sm:$0xff]
    %v398 = vld [vmem:[#allocation9 + $0x170] sm:$0xff]
    %v399 = vld [vmem:[#allocation9 + $0x178] sm:$0xff]
    %v400 = vld [vmem:[#allocation9 + $0x180] sm:$0xff]
    %v401 = vld [vmem:[#allocation9 + $0x188] sm:$0xff]
    %v402 = vld [vmem:[#allocation9 + $0x190] sm:$0xff]
    %v403 = vld [vmem:[#allocation9 + $0x198] sm:$0xff]
    %v404 = vld [vmem:[#allocation9 + $0x1a0] sm:$0xff]
    %v405 = vld [vmem:[#allocation9 + $0x1a8] sm:$0xff]
    %v406 = vld [vmem:[#allocation9 + $0x1b0] sm:$0xff]
    %v407 = vld [vmem:[#allocation9 + $0x1b8] sm:$0xff]
    %v408 = vld [vmem:[#allocation9 + $0x1c0] sm:$0xff]
    %v409 = vld [vmem:[#allocation9 + $0x1c8] sm:$0xff]
    %v410 = vld [vmem:[#allocation9 + $0x1d0] sm:$0xff]
    %v411 = vld [vmem:[#allocation9 + $0x1d8] sm:$0xff]
    %v412 = vld [vmem:[#allocation9 + $0x1e0] sm:$0xff]
    %v413 = vld [vmem:[#allocation9 + $0x1e8] sm:$0xff]
    %v414 = vld [vmem:[#allocation9 + $0x1f0] sm:$0xff]
    %v415 = vld [vmem:[#allocation9 + $0x1f8] sm:$0xff]
    %v416 = vld [vmem:[#allocation9 + $0x200] sm:$0xff]
    %v417 = vld [vmem:[#allocation9 + $0x208] sm:$0xff]
    %v418 = vld [vmem:[#allocation9 + $0x210] sm:$0xff]
    %v419 = vld [vmem:[#allocation9 + $0x218] sm:$0xff]
    %v420 = vld [vmem:[#allocation9 + $0x220] sm:$0xff]
    %v421 = vld [vmem:[#allocation9 + $0x228] sm:$0xff]
    %v422 = vld [vmem:[#allocation9 + $0x230] sm:$0xff]
    %v423 = vld [vmem:[#allocation9 + $0x238] sm:$0xff]
    %v424 = vld [vmem:[#allocation9 + $0x240] sm:$0xff]
    %v425 = vld [vmem:[#allocation9 + $0x248] sm:$0xff]
    %v426 = vld [vmem:[#allocation9 + $0x250] sm:$0xff]
    %v427 = vld [vmem:[#allocation9 + $0x258] sm:$0xff]
    %v428 = vld [vmem:[#allocation9 + $0x260] sm:$0xff]
    %v429 = vld [vmem:[#allocation9 + $0x268] sm:$0xff]
    %v430 = vld [vmem:[#allocation9 + $0x270] sm:$0xff]
    %v431 = vld [vmem:[#allocation9 + $0x278] sm:$0xff]
    %v432 = vld [vmem:[#allocation9 + $0x280] sm:$0xff]
    %v433 = vld [vmem:[#allocation9 + $0x288] sm:$0xff]
    %s434 = scalar_lea.vmem [#allocation9], 656
    %v435 = vld [vmem:[%s434] ss:$8 sm:$0x3]
    %v437 = vsel %vm229, %v385, 0
    %439 = vmatpush.msra.mxu0 0.0
    %440 = vmatpush.msra.mxu0 0.0
    %441 = vmatpush.msra.mxu0 0.0
    %442 = vmatpush.msra.mxu0 0.0
    %443 = vmatpush.msra.mxu0 0.0
    %444 = vmatpush.msra.mxu0 0.0
    %445 = vmatpush.msra.mxu0 0.0
    %446 = vmatpush.msra.mxu0 0.0
    %447 = vmatpush.msra.mxu0 %v416
    %448 = vmatpush.msra.mxu0 %v414
    %449 = vmatpush.msra.mxu0 %v412
    %450 = vmatpush.msra.mxu0 %v410
    %451 = vmatpush.msra.mxu0 %v408
    %452 = vmatpush.msra.mxu0 %v406
    %453 = vmatpush.msra.mxu0 %v404
    %454 = vmatpush.msra.mxu0 %v402
    %455 = vmatmul.f32.gmra.mxu0 %v437
    %v456 = vpop.f32.mrf.mxu0
    %v457 = vadd.f32 0.0, %v456
    %458 = vdwg.mxu0
    %459 = vmatpush.msra.mxu0 0.0
    %460 = vmatpush.msra.mxu0 0.0
    %461 = vmatpush.msra.mxu0 0.0
    %462 = vmatpush.msra.mxu0 0.0
    %463 = vmatpush.msra.mxu0 0.0
    %464 = vmatpush.msra.mxu0 0.0
    %465 = vmatpush.msra.mxu0 0.0
    %466 = vmatpush.msra.mxu0 0.0
    %467 = vmatpush.msra.mxu0 %v417
    %468 = vmatpush.msra.mxu0 %v415
    %469 = vmatpush.msra.mxu0 %v413
    %470 = vmatpush.msra.mxu0 %v411
    %471 = vmatpush.msra.mxu0 %v409
    %472 = vmatpush.msra.mxu0 %v407
    %473 = vmatpush.msra.mxu0 %v405
    %474 = vmatpush.msra.mxu0 %v403
    %475 = vmatmul.f32.gmra.mxu0 %v437
    %v476 = vpop.f32.mrf.mxu0
    %v477 = vadd.f32 0.0, %v476
    %478 = vdwg.mxu0
    %v480 = vsel %vm229, %v384, 0
    %482 = vmatpush.msra.mxu0 0.0
    %483 = vmatpush.msra.mxu0 0.0
    %484 = vmatpush.msra.mxu0 0.0
    %485 = vmatpush.msra.mxu0 0.0
    %486 = vmatpush.msra.mxu0 0.0
    %487 = vmatpush.msra.mxu0 0.0
    %488 = vmatpush.msra.mxu0 0.0
    %489 = vmatpush.msra.mxu0 0.0
    %490 = vmatpush.msra.mxu0 %v400
    %491 = vmatpush.msra.mxu0 %v398
    %492 = vmatpush.msra.mxu0 %v396
    %493 = vmatpush.msra.mxu0 %v394
    %494 = vmatpush.msra.mxu0 %v392
    %495 = vmatpush.msra.mxu0 %v390
    %496 = vmatpush.msra.mxu0 %v388
    %497 = vmatpush.msra.mxu0 %v386
    %498 = vmatmul.f32.gmra.mxu0 %v480
    %v499 = vpop.f32.mrf.mxu0
    %v500 = vadd.f32 %v457, %v499
    %501 = vdwg.mxu0
    %502 = vmatpush.msra.mxu0 0.0
    %503 = vmatpush.msra.mxu0 0.0
    %504 = vmatpush.msra.mxu0 0.0
    %505 = vmatpush.msra.mxu0 0.0
    %506 = vmatpush.msra.mxu0 0.0
    %507 = vmatpush.msra.mxu0 0.0
    %508 = vmatpush.msra.mxu0 0.0
    %509 = vmatpush.msra.mxu0 0.0
    %510 = vmatpush.msra.mxu0 %v401
    %511 = vmatpush.msra.mxu0 %v399
    %512 = vmatpush.msra.mxu0 %v397
    %513 = vmatpush.msra.mxu0 %v395
    %514 = vmatpush.msra.mxu0 %v393
    %515 = vmatpush.msra.mxu0 %v391
    %516 = vmatpush.msra.mxu0 %v389
    %517 = vmatpush.msra.mxu0 %v387
    %518 = vmatmul.f32.gmra.mxu0 %v480
    %v519 = vpop.f32.mrf.mxu0
    %v520 = vadd.f32 %v477, %v519
    %521 = vdwg.mxu0
    %v523 = vperm.slane %v435, 0
    %v524 = vperm.slane %v435, 1
    %v527 = vadd.f32 %v500, %v523
    %v528 = vadd.f32 %v520, %v524
    %529 = vmatpush.msra.mxu0 0.0
    %530 = vmatpush.msra.mxu0 0.0
    %531 = vmatpush.msra.mxu0 0.0
    %532 = vmatpush.msra.mxu0 0.0
    %533 = vmatpush.msra.mxu0 0.0
    %534 = vmatpush.msra.mxu0 0.0
    %535 = vmatpush.msra.mxu0 0.0
    %536 = vmatpush.msra.mxu0 0.0
    %537 = vmatpush.msra.mxu0 %v432
    %538 = vmatpush.msra.mxu0 %v430
    %539 = vmatpush.msra.mxu0 %v428
    %540 = vmatpush.msra.mxu0 %v426
    %541 = vmatpush.msra.mxu0 %v424
    %542 = vmatpush.msra.mxu0 %v422
    %543 = vmatpush.msra.mxu0 %v420
    %544 = vmatpush.msra.mxu0 %v418
    %545 = vmatmul.f32.gmra.mxu0 %v231
    %v546 = vpop.f32.mrf.mxu0
    %v547 = vadd.f32 0.0, %v546
    %548 = vdwg.mxu0
    %549 = vmatpush.msra.mxu0 0.0
    %550 = vmatpush.msra.mxu0 0.0
    %551 = vmatpush.msra.mxu0 0.0
    %552 = vmatpush.msra.mxu0 0.0
    %553 = vmatpush.msra.mxu0 0.0
    %554 = vmatpush.msra.mxu0 0.0
    %555 = vmatpush.msra.mxu0 0.0
    %556 = vmatpush.msra.mxu0 0.0
    %557 = vmatpush.msra.mxu0 %v433
    %558 = vmatpush.msra.mxu0 %v431
    %559 = vmatpush.msra.mxu0 %v429
    %560 = vmatpush.msra.mxu0 %v427
    %561 = vmatpush.msra.mxu0 %v425
    %562 = vmatpush.msra.mxu0 %v423
    %563 = vmatpush.msra.mxu0 %v421
    %564 = vmatpush.msra.mxu0 %v419
    %565 = vmatmul.f32.gmra.mxu0 %v231
    %v566 = vpop.f32.mrf.mxu0
    %v567 = vadd.f32 0.0, %v566
    %568 = vdwg.mxu0
    %v569 = vadd.f32 %v527, %v547
    %v570 = vadd.f32 %v528, %v567
    %v571 = vmul.f32 %v569, 0.5
    %v572 = vmul.f32 %v570, 0.5
    %v573 = vsel %vm97, %v569, %v571
    %v574 = vsel %vm98, %v570, %v572
    %v575 = vtanh.pop %v573
    %v576 = vtanh.pop %v574
    %v577 = vmul.f32 %v575, 0.5
    %v578 = vmul.f32 %v576, 0.5
    %v579 = vadd.f32 %v577, 0.5
    %v580 = vadd.f32 %v578, 0.5
    %v581 = vsel %vm97, %v575, %v579
    %v582 = vsel %vm98, %v576, %v580
    %v583 = vmul.f32 %v581, 0.0
    %v584 = vmul.f32 %v581, %v582
    %586 = vrot.lane.b32.xlu0 %v584, 64
    %v587 = vpop.permute.xlu0 %586
    %v589 = vadd.f32 %v583, %v587
    %v590 = vtanh.pop %v589
    %v591 = vmul.f32 %v582, %v590
    %593 = vrot.lane.b32.xlu0 %v591, 64
    %v594 = vpop.permute.xlu0 %593
    %596 = vst.msk [vmem:[#allocation4] sm:$0x1] %vm300, %v594
    %597 = vst.msk [vmem:[#allocation5 + $0x1] sm:$0x1] %vm300, %v594
    %v598 = vsel %vm229, %v594, 0
    %600 = vmatpush.msra.mxu0 0.0
    %601 = vmatpush.msra.mxu0 0.0
    %602 = vmatpush.msra.mxu0 0.0
    %603 = vmatpush.msra.mxu0 0.0
    %604 = vmatpush.msra.mxu0 0.0
    %605 = vmatpush.msra.mxu0 0.0
    %606 = vmatpush.msra.mxu0 0.0
    %607 = vmatpush.msra.mxu0 0.0
    %608 = vmatpush.msra.mxu0 %v432
    %609 = vmatpush.msra.mxu0 %v430
    %610 = vmatpush.msra.mxu0 %v428
    %611 = vmatpush.msra.mxu0 %v426
    %612 = vmatpush.msra.mxu0 %v424
    %613 = vmatpush.msra.mxu0 %v422
    %614 = vmatpush.msra.mxu0 %v420
    %615 = vmatpush.msra.mxu0 %v418
    %616 = vmatmul.f32.gmra.mxu0 %v598
    %v617 = vpop.f32.mrf.mxu0
    %v618 = vadd.f32 0.0, %v617
    %619 = vdwg.mxu0
    %620 = vmatpush.msra.mxu0 0.0
    %621 = vmatpush.msra.mxu0 0.0
    %622 = vmatpush.msra.mxu0 0.0
    %623 = vmatpush.msra.mxu0 0.0
    %624 = vmatpush.msra.mxu0 0.0
    %625 = vmatpush.msra.mxu0 0.0
    %626 = vmatpush.msra.mxu0 0.0
    %627 = vmatpush.msra.mxu0 0.0
    %628 = vmatpush.msra.mxu0 %v433
    %629 = vmatpush.msra.mxu0 %v431
    %630 = vmatpush.msra.mxu0 %v429
    %631 = vmatpush.msra.mxu0 %v427
    %632 = vmatpush.msra.mxu0 %v425
    %633 = vmatpush.msra.mxu0 %v423
    %634 = vmatpush.msra.mxu0 %v421
    %635 = vmatpush.msra.mxu0 %v419
    %636 = vmatmul.f32.gmra.mxu0 %v598
    %v637 = vpop.f32.mrf.mxu0
    %v638 = vadd.f32 0.0, %v637
    %639 = vdwg.mxu0
    %v642 = vrot.slane %v618, 7
    %v643 = vrot.slane %v638, 7
    %v646 = vadd.f32 %v527, %v642
    %v647 = vadd.f32 %v528, %v643
    %v648 = vmul.f32 %v646, 0.5
    %v649 = vmul.f32 %v647, 0.5
    %v650 = vsel %vm97, %v646, %v648
    %v651 = vsel %vm98, %v647, %v649
    %v652 = vtanh.pop %v650
    %v653 = vtanh.pop %v651
    %v654 = vmul.f32 %v652, 0.5
    %v655 = vmul.f32 %v653, 0.5
    %v656 = vadd.f32 %v654, 0.5
    %v657 = vadd.f32 %v655, 0.5
    %v658 = vsel %vm97, %v652, %v656
    %v659 = vsel %vm98, %v653, %v657
    %v661 = vrot.slane %v589, 7
    %v663 = vmul.f32 %v658, %v661
    %v664 = vmul.f32 %v658, %v659
    %666 = vrot.lane.b32.xlu0 %v664, 64
    %v667 = vpop.permute.xlu0 %666
    %v669 = vadd.f32 %v663, %v667
    %v670 = vtanh.pop %v669
    %v671 = vmul.f32 %v659, %v670
    %673 = vrot.lane.b32.xlu0 %v671, 64
    %v674 = vpop.permute.xlu0 %673
    %676 = vst.msk [vmem:[#allocation4] sm:$0x2] %vm381, %v674
    %677 = vst.msk [vmem:[#allocation5 - $0x1] sm:$0x2] %vm381, %v674
    %v678 = vld [vmem:[#allocation4] sm:$0x3]
    %v679 = vld [vmem:[#allocation5] sm:$0x3]
    %v680 = vld [vmem:[#allocation11] sm:$0xff]
    %v681 = vld [vmem:[#allocation11 + $0x8] sm:$0xff]
    %v682 = vld [vmem:[#allocation11 + $0x10] sm:$0xff]
    %v683 = vld [vmem:[#allocation11 + $0x18] sm:$0xff]
    %v684 = vld [vmem:[#allocation11 + $0x20] sm:$0xff]
    %v685 = vld [vmem:[#allocation11 + $0x28] sm:$0xff]
    %v686 = vld [vmem:[#allocation11 + $0x30] sm:$0xff]
    %v687 = vld [vmem:[#allocation11 + $0x38] sm:$0xff]
    %v688 = vld [vmem:[#allocation11 + $0x40] sm:$0xff]
    %v689 = vld [vmem:[#allocation11 + $0x48] sm:$0xff]
    %v690 = vld [vmem:[#allocation11 + $0x50] sm:$0xff]
    %v691 = vld [vmem:[#allocation11 + $0x58] sm:$0xff]
    %v692 = vld [vmem:[#allocation11 + $0x60] sm:$0xff]
    %v693 = vld [vmem:[#allocation11 + $0x68] sm:$0xff]
    %v694 = vld [vmem:[#allocation11 + $0x70] sm:$0xff]
    %v695 = vld [vmem:[#allocation11 + $0x78] sm:$0xff]
    %v696 = vld [vmem:[#allocation11 + $0x80] sm:$0xff]
    %v697 = vld [vmem:[#allocation11 + $0x88] sm:$0xff]
    %v698 = vld [vmem:[#allocation11 + $0x90] sm:$0xff]
    %v699 = vld [vmem:[#allocation11 + $0x98] sm:$0xff]
    %v700 = vld [vmem:[#allocation11 + $0xa0] sm:$0xff]
    %v701 = vld [vmem:[#allocation11 + $0xa8] sm:$0xff]
    %v702 = vld [vmem:[#allocation11 + $0xb0] sm:$0xff]
    %v703 = vld [vmem:[#allocation11 + $0xb8] sm:$0xff]
    %v704 = vld [vmem:[#allocation11 + $0xc0] sm:$0xff]
    %v705 = vld [vmem:[#allocation11 + $0xc8] sm:$0xff]
    %v706 = vld [vmem:[#allocation11 + $0xd0] sm:$0xff]
    %v707 = vld [vmem:[#allocation11 + $0xd8] sm:$0xff]
    %v708 = vld [vmem:[#allocation11 + $0xe0] sm:$0xff]
    %v709 = vld [vmem:[#allocation11 + $0xe8] sm:$0xff]
    %v710 = vld [vmem:[#allocation11 + $0xf0] sm:$0xff]
    %v711 = vld [vmem:[#allocation11 + $0xf8] sm:$0xff]
    %v712 = vld [vmem:[#allocation11 + $0x100] sm:$0x1]
    %v713 = vld [vmem:[#allocation11 + $0x101] sm:$0x1]
    %v715 = vsel %vm229, %v679, 0
    %717 = vmatpush.msra.mxu0 0.0
    %718 = vmatpush.msra.mxu0 0.0
    %719 = vmatpush.msra.mxu0 0.0
    %720 = vmatpush.msra.mxu0 0.0
    %721 = vmatpush.msra.mxu0 0.0
    %722 = vmatpush.msra.mxu0 0.0
    %723 = vmatpush.msra.mxu0 0.0
    %724 = vmatpush.msra.mxu0 0.0
    %725 = vmatpush.msra.mxu0 %v695
    %726 = vmatpush.msra.mxu0 %v694
    %727 = vmatpush.msra.mxu0 %v693
    %728 = vmatpush.msra.mxu0 %v692
    %729 = vmatpush.msra.mxu0 %v691
    %730 = vmatpush.msra.mxu0 %v690
    %731 = vmatpush.msra.mxu0 %v689
    %732 = vmatpush.msra.mxu0 %v688
    %733 = vmatmul.f32.gmra.mxu0 %v715
    %v734 = vpop.f32.mrf.mxu0
    %v735 = vadd.f32 0.0, %v734
    %736 = vdwg.mxu0
    %v738 = vsel %vm229, %v678, 0
    %740 = vmatpush.msra.mxu0 0.0
    %741 = vmatpush.msra.mxu0 0.0
    %742 = vmatpush.msra.mxu0 0.0
    %743 = vmatpush.msra.mxu0 0.0
    %744 = vmatpush.msra.mxu0 0.0
    %745 = vmatpush.msra.mxu0 0.0
    %746 = vmatpush.msra.mxu0 0.0
    %747 = vmatpush.msra.mxu0 0.0
    %748 = vmatpush.msra.mxu0 %v687
    %749 = vmatpush.msra.mxu0 %v686
    %750 = vmatpush.msra.mxu0 %v685
    %751 = vmatpush.msra.mxu0 %v684
    %752 = vmatpush.msra.mxu0 %v683
    %753 = vmatpush.msra.mxu0 %v682
    %754 = vmatpush.msra.mxu0 %v681
    %755 = vmatpush.msra.mxu0 %v680
    %756 = vmatmul.f32.gmra.mxu0 %v738
    %v757 = vpop.f32.mrf.mxu0
    %v758 = vadd.f32 %v735, %v757
    %759 = vdwg.mxu0
    %v760 = vperm.slane %v712, 0
    %v761 = vadd.f32 %v758, %v760
    %v762 = vtanh.pop %v761
    %v763 = vperm.slane %v713, 0
    %764 = vmatpush.msra.mxu0 %v711
    %765 = vmatpush.msra.mxu0 %v710
    %766 = vmatpush.msra.mxu0 %v709
    %767 = vmatpush.msra.mxu0 %v708
    %768 = vmatpush.msra.mxu0 %v707
    %769 = vmatpush.msra.mxu0 %v706
    %770 = vmatpush.msra.mxu0 %v705
    %771 = vmatpush.msra.mxu0 %v704
    %772 = vmatpush.msra.mxu0 %v703
    %773 = vmatpush.msra.mxu0 %v702
    %774 = vmatpush.msra.mxu0 %v701
    %775 = vmatpush.msra.mxu0 %v700
    %776 = vmatpush.msra.mxu0 %v699
    %777 = vmatpush.msra.mxu0 %v698
    %778 = vmatpush.msra.mxu0 %v697
    %779 = vmatpush.msra.mxu0 %v696
    %780 = vmatmul.f32.gmra.mxu0 %v762
    %v781 = vpop.f32.mrf.mxu0
    %v782 = vadd.f32 %v763, %v781
    %783 = vdwg.mxu0
    %784 = vst [vmem:[#allocation12] sm:$0x3] %v782
    // Predicated region
    $region26: #{sentiment_head_forward.1} parent=1 // pred_check
      _
    $region27: #{sentiment_head_forward.1} parent=1 // pred_check_branch
      %786 = sbr.rel (0) target = $region29
    $region28: #{sentiment_head_forward.1} parent=1 // pred_region
      %788 = vsyncadd [#allocation8], 0
      %s790 = sshll.u32 [#allocation12], 4
      %s791 = int_to_ptr.vmem [resolvable:$true] %s790
      %s792 = sshll.u32 %s3, 4
      %s793 = int_to_ptr.hbm [resolvable:$true] %s792
      %795 = dma.vmem_to_hbm [thread:$0]  %s791, 32, %s793, [#allocation8]
    $region29: #{sentiment_head_forward.1} parent=1 // pred_fallthru
      _
    // Predicated region
    $region30: #{sentiment_head_forward.1} parent=1 // pred_check
      _
    $region31: #{sentiment_head_forward.1} parent=1 // pred_check_branch
      %797 = sbr.rel (0) target = $region33
    $region32: #{sentiment_head_forward.1} parent=1 // pred_region
      %799 = dma.done [#allocation8], 32
    $region33: #{sentiment_head_forward.1} parent=1 // pred_fallthru
      _
    %800 = vsyncpa [#allocation7], 1
    %801 = vsyncpa [#allocation10], 1
    %802 = vsyncpa [#allocation8], 1

</llo_original>
